<compile_context>
chip_gen: v5e
topology: v5e:2x2
jax: 0.10.0
libtpu: 0.0.40
codegen_flags: <defaults>
</compile_context>

<pallas_src>
import functools

import numpy as np

import jax
import jax.numpy as jnp
from jax.experimental import pallas as pl
from jax.experimental.pallas import tpu as pltpu


def _round_up(a, b):
    return pl.cdiv(a, b) * b


def _balanced_row_tile(n_rows, row_tile):
    """Even row tiles: multiple of 8, ~row_tile wide, minimal tail padding."""
    n_tiles = max(1, pl.cdiv(n_rows, row_tile))
    return max(8, _round_up(pl.cdiv(n_rows, n_tiles), 8))


def _bn_conv_im2col_kernel(x_ref, w_ref, scale_ref, shift_ref, o_ref, *, relu):
    """One (batch, row-tile) block: a single deep MXU matmul + BN epilogue.

    x_ref:     (1, tl, Kc_pad)      K shifted C_in slabs, tap-major
    w_ref:     (Kc_pad, C_out_pad)  im2col'd conv weight
    scale_ref: (1, C_out_pad)       folded BN scale (f32)
    shift_ref: (1, C_out_pad)       folded BN shift (f32)
    o_ref:     (1, tl, C_out_pad)
    """
    acc = jnp.dot(x_ref[0], w_ref[...], preferred_element_type=jnp.float32)
    if relu:
        acc = jnp.maximum(acc, 0.0)
    o_ref[0] = (acc * scale_ref[...] + shift_ref[...]).astype(o_ref.dtype)


def _bn_conv_tap_kernel(x_ref, w_ref, scale_ref, shift_ref, o_ref, *, relu):
    """One (batch, row-tile) block: K tap matmuls into an f32 accumulator.

    x_ref:     (1, x_len, C_in)      full padded sequence of this batch elem
    w_ref:     (K, C_in, C_out_pad)  conv weight, tap-major
    scale_ref / shift_ref / o_ref:   as above
    """
    K = w_ref.shape[0]
    tl = o_ref.shape[1]
    # tl is a multiple of 8, so the tile base is sublane-aligned -> hint it.
    base = pl.multiple_of(pl.program_id(1) * tl, 8)
    # Seed the accumulator with tap 0 (saves a zeros-init + add pass).
    acc = jnp.dot(x_ref[0, pl.ds(base, tl), :], w_ref[0],
                  preferred_element_type=jnp.float32)
    for k in range(1, K):  # K is small & static -> unrolled MXU matmuls
        acc = acc + jnp.dot(x_ref[0, pl.ds(base + k, tl), :], w_ref[k],
                            preferred_element_type=jnp.float32)
    if relu:
        acc = jnp.maximum(acc, 0.0)
    o_ref[0] = (acc * scale_ref[...] + shift_ref[...]).astype(o_ref.dtype)


def batchnorm_conv_forward(x, w, gamma, beta, running_mean, running_var, *,
                           eps=1e-5, relu=True,
                           compute_dtype=jnp.bfloat16,
                           out_dtype=jnp.float32,
                           row_tile=256,
                           channels_last=False):
    """Fused Conv1d(bias=False) -> optional ReLU -> BatchNorm1d (eval stats).

    x: (B, C_in, L) float32   (or (B, L, C_in) if channels_last=True)
    w: (C_out, C_in, K) conv weight
    gamma / beta / running_mean / running_var: (C_out,)
    Returns (B, C_out, L_out) (or channel-last), L_out = L for odd K ("same").
    """
    C_out, C_in_w, K = w.shape
    if channels_last:
        B, L, C_in = x.shape
        xt = x
    else:
        B, C_in, L = x.shape
        xt = jnp.transpose(x, (0, 2, 1))                     # (B, L, C_in)
    assert C_in == C_in_w, "conv weight in_channels mismatch"
    pad = K // 2
    L_out = L + 2 * pad - K + 1

    tl = _balanced_row_tile(L_out, row_tile)
    L_out_pad = _round_up(L_out, tl)
    C_out_pad = _round_up(C_out, 128)        # lane-dense unmasked stores

    # Fold BatchNorm (eval mode) into per-channel scale/shift, kept in f32.
    scale = (gamma / jnp.sqrt(running_var + eps)).astype(jnp.float32)
    shift = (beta - running_mean * scale).astype(jnp.float32)
    scale = jnp.pad(scale, (0, C_out_pad - C_out)).reshape(1, C_out_pad)
    shift = jnp.pad(shift, (0, C_out_pad - C_out)).reshape(1, C_out_pad)

    xt = xt.astype(compute_dtype)
    itemsize = np.dtype(compute_dtype).itemsize
    # im2col only pays off when the per-tap contraction is shallow.
    use_im2col = (C_in < 128) and (K * C_in <= 1024)

    if use_im2col:
        # ---- fold the K taps into the contraction dim (host-side) --------
        Kc = K * C_in
        Kc_pad = _round_up(Kc, 128)
        xp = jnp.pad(xt, ((0, 0), (pad, pad + (L_out_pad - L_out)), (0, 0)))
        xim = jnp.concatenate([xp[:, k:k + L_out_pad, :] for k in range(K)],
                              axis=-1)                       # (B, Lp, K*C_in)
        xim = jnp.pad(xim, ((0, 0), (0, 0), (0, Kc_pad - Kc)))
        wim = jnp.transpose(w, (2, 1, 0)).reshape(Kc, C_out)  # tap-major rows
        wim = jnp.pad(wim, ((0, Kc_pad - Kc), (0, C_out_pad - C_out)))
        wim = wim.astype(compute_dtype)

        kernel = functools.partial(_bn_conv_im2col_kernel, relu=bool(relu))
        x_arg, w_arg = xim, wim
        x_block, x_index = (1, tl, Kc_pad), (lambda b, i: (b, i, 0))
        w_block, w_index = (Kc_pad, C_out_pad), (lambda b, i: (0, 0))
        x_big = False                      # x is tiled per row tile -> small
    else:
        # ---- wide C_in: K tap matmuls, full padded sequence per batch -----
        x_len = L_out_pad + K - 1
        xp = jnp.pad(xt, ((0, 0), (pad, x_len - L - pad), (0, 0)))
        wt = jnp.transpose(w, (2, 1, 0))                     # (K, C_in, C_out)
        wt = jnp.pad(wt, ((0, 0), (0, 0), (0, C_out_pad - C_out)))
        wt = wt.astype(compute_dtype)

        kernel = functools.partial(_bn_conv_tap_kernel, relu=bool(relu))
        x_arg, w_arg = xp, wt
        x_block, x_index = (1, x_len, C_in), (lambda b, i: (b, 0, 0))
        w_block, w_index = (K, C_in, C_out_pad), (lambda b, i: (0, 0, 0))
        # Per-batch x block only changes once per batch; single-buffer it if
        # it is large (one exposed DMA per batch beats 2x VMEM on v7x).
        x_big = (x_len * C_in * itemsize) > (4 << 20)

    # VMEM footprint estimate -> explicit scoped-VMEM limit (clamped so it is
    # never below the default and never above v7x's 64 MiB).
    def _sz(shape, isz, nbuf):
        n = 1
        for s in shape:
            n *= int(s)
        return n * isz * nbuf

    est = (_sz(x_block, itemsize, 1 if x_big else 2)
           + _sz(w_block, itemsize, 1)
           + 2 * _sz((1, C_out_pad), 4, 1)
           + _sz((1, tl, C_out_pad), np.dtype(out_dtype).itemsize, 2))
    vmem_limit = int(min(max(2 * est, 32 * 1024 * 1024), 64 * 1024 * 1024))

    grid = (B, L_out_pad // tl)

    def run(single_buffer_consts):
        def const_spec(shape, index_map):
            # Constant-index blocks gain nothing from double-buffering.
            if single_buffer_consts:
                return pl.BlockSpec(shape, index_map,
                                    pipeline_mode=pl.Buffered(1))
            return pl.BlockSpec(shape, index_map)

        if x_big and single_buffer_consts:
            x_spec = pl.BlockSpec(x_block, x_index,
                                  pipeline_mode=pl.Buffered(1))
        else:
            x_spec = pl.BlockSpec(x_block, x_index)

        return pl.pallas_call(
            kernel,
            out_shape=jax.ShapeDtypeStruct((B, L_out_pad, C_out_pad),
                                           out_dtype),
            grid_spec=pltpu.PrefetchScalarGridSpec(
                num_scalar_prefetch=0,
                grid=grid,
                in_specs=[
                    x_spec,
                    const_spec(w_block, w_index),
                    const_spec((1, C_out_pad), lambda b, i: (0, 0)),
                    const_spec((1, C_out_pad), lambda b, i: (0, 0)),
                ],
                out_specs=pl.BlockSpec((1, tl, C_out_pad),
                                       lambda b, i: (b, i, 0)),
            ),
            compiler_params=pltpu.CompilerParams(
                dimension_semantics=("parallel", "parallel"),
                vmem_limit_bytes=vmem_limit),
        )(x_arg, w_arg, scale, shift)

    try:
        out = run(True)
    except Exception:
        # pipeline_mode / pl.Buffered not supported by this JAX build: fall
        # back to default double-buffering (identical results, more VMEM).
        out = run(False)

    out = out[:, :L_out, :C_out]                 # strip row/channel padding
    if channels_last:
        return out
    return jnp.transpose(out, (0, 2, 1))


def _reference(x, w, gamma, beta, mean, var, eps, relu):
    """Pure-JAX reference for Conv1d -> ReLU -> BatchNorm1d (eval mode)."""
    K = w.shape[-1]
    y = jax.lax.conv_general_dilated(
        x, w, window_strides=(1,), padding=[(K // 2, K // 2)],
        dimension_numbers=("NCH", "OIH", "NCH"))
    if relu:
        y = jnp.maximum(y, 0.0)
    inv = 1.0 / jnp.sqrt(var + eps)
    return ((y - mean[None, :, None]) * inv[None, :, None]
            * gamma[None, :, None] + beta[None, :, None])


if __name__ == "__main__":
    eps = 1e-5
    key = jax.random.PRNGKey(0)
    kx, kw, kg, kb, km, kv, k2 = jax.random.split(key, 7)

    # ---- Case 1: BatchNormConv(4, 8, 5) -- small C_in -> im2col path ------
    B, C_in, L, C_out, K = 2, 4, 16, 8, 5
    x = jax.random.normal(kx, (B, C_in, L), jnp.float32)
    bound = 1.0 / jnp.sqrt(jnp.float32(C_in * K))
    w = jax.random.uniform(kw, (C_out, C_in, K), jnp.float32, -bound, bound)
    gamma = jax.random.uniform(kg, (C_out,), jnp.float32, 0.5, 1.5)
    beta = 0.1 * jax.random.normal(kb, (C_out,), jnp.float32)
    mean = 0.1 * jax.random.normal(km, (C_out,), jnp.float32)
    var = jax.random.uniform(kv, (C_out,), jnp.float32, 0.5, 1.5)

    ref = _reference(x, w, gamma, beta, mean, var, eps, True)
    ref_nr = _reference(x, w, gamma, beta, mean, var, eps, False)

    # Default performance path: bf16 MXU operands, f32 accumulation/epilogue.
    out_bf = jax.block_until_ready(
        batchnorm_conv_forward(x, w, gamma, beta, mean, var,
                               eps=eps, relu=True))
    assert out_bf.shape == (B, C_out, L)
    assert jnp.allclose(out_bf, ref, atol=5e-2, rtol=5e-2)

    # f32 operands: tight check, relu on and off.
    out_f32 = jax.block_until_ready(
        batchnorm_conv_forward(x, w, gamma, beta, mean, var, eps=eps,
                               relu=True, compute_dtype=jnp.float32))
    assert jnp.allclose(out_f32, ref, atol=1e-4, rtol=1e-4)

    out_nr = jax.block_until_ready(
        batchnorm_conv_forward(x, w, gamma, beta, mean, var, eps=eps,
                               relu=False, compute_dtype=jnp.float32))
    assert jnp.allclose(out_nr, ref_nr, atol=1e-4, rtol=1e-4)

    # Channel-last in/out (per-layer transposes hoisted to stack boundary).
    out_cl = jax.block_until_ready(
        batchnorm_conv_forward(jnp.transpose(x, (0, 2, 1)), w, gamma, beta,
                               mean, var, eps=eps, relu=True,
                               compute_dtype=jnp.float32, channels_last=True))
    assert jnp.allclose(out_cl, jnp.transpose(ref, (0, 2, 1)),
                        atol=1e-4, rtol=1e-4)

    # ---- Case 2: wide C_in -> tap-loop path (deep contraction) ------------
    B2, C_in2, L2, C_out2, K2 = 1, 256, 32, 64, 3
    keys = jax.random.split(k2, 6)
    x2 = jax.random.normal(keys[0], (B2, C_in2, L2), jnp.float32)
    bound2 = 1.0 / jnp.sqrt(jnp.float32(C_in2 * K2))
    w2 = jax.random.uniform(keys[1], (C_out2, C_in2, K2), jnp.float32,
                            -bound2, bound2)
    gamma2 = jax.random.uniform(keys[2], (C_out2,), jnp.float32, 0.5, 1.5)
    beta2 = 0.1 * jax.random.normal(keys[3], (C_out2,), jnp.float32)
    mean2 = 0.1 * jax.random.normal(keys[4], (C_out2,), jnp.float32)
    var2 = jax.random.uniform(keys[5], (C_out2,), jnp.float32, 0.5, 1.5)

    ref2 = _reference(x2, w2, gamma2, beta2, mean2, var2, eps, True)
    out2 = jax.block_until_ready(
        batchnorm_conv_forward(x2, w2, gamma2, beta2, mean2, var2, eps=eps,
                               relu=True, compute_dtype=jnp.float32))
    assert out2.shape == (B2, C_out2, L2)
    assert jnp.allclose(out2, ref2, atol=1e-3, rtol=1e-3)

    print("KERNEL_OK")
</pallas_src>

<mosaic_0001>
module attributes {stable_mosaic.version = 11 : i64} {
  func.func @_bn_conv_im2col_kernel(%arg0: i32, %arg1: i32, %arg2: memref<1x16x128xbf16, #tpu.memory_space<vmem>>, %arg3: memref<128x128xbf16, #tpu.memory_space<vmem>>, %arg4: memref<1x128xf32, #tpu.memory_space<vmem>>, %arg5: memref<1x128xf32, #tpu.memory_space<vmem>>, %arg6: memref<1x16x128xf32, #tpu.memory_space<vmem>>) attributes {dimension_semantics = [#tpu.dimension_semantics<parallel>, #tpu.dimension_semantics<parallel>], iteration_bounds = array<i64: 2, 1>, scalar_prefetch = 0 : i64, scratch_operands = 0 : i64, tpu.core_type = #tpu.core_type<tc>, window_params = [{transform_indices = @transform_0, window_bounds = array<i64: 1, 16, 128>}, {pipeline_mode = #tpu.pipeline_mode<synchronous>, transform_indices = @transform_1, window_bounds = array<i64: 128, 128>}, {pipeline_mode = #tpu.pipeline_mode<synchronous>, transform_indices = @transform_2, window_bounds = array<i64: 1, 128>}, {pipeline_mode = #tpu.pipeline_mode<synchronous>, transform_indices = @transform_3, window_bounds = array<i64: 1, 128>}, {transform_indices = @transform_4, window_bounds = array<i64: 1, 16, 128>}]} {
    %c0 = arith.constant 0 : index
    %c0_0 = arith.constant 0 : index
    %c0_1 = arith.constant 0 : index
    %0 = vector.load %arg2[%c0, %c0_0, %c0_1] : memref<1x16x128xbf16, #tpu.memory_space<vmem>>, vector<1x16x128xbf16>
    %1 = vector.shape_cast %0 : vector<1x16x128xbf16> to vector<16x128xbf16>
    %c0_2 = arith.constant 0 : index
    %c0_3 = arith.constant 0 : index
    %2 = vector.load %arg3[%c0_2, %c0_3] : memref<128x128xbf16, #tpu.memory_space<vmem>>, vector<128x128xbf16>
    %cst = arith.constant dense<0.000000e+00> : vector<16x128xf32>
    %3 = tpu.matmul %1, %2, %cst {dimension_numbers = #tpu.dot_dimension_numbers<[1], [0], [0], [1], [0, 0, 1, 1], [], []>} : vector<16x128xbf16>, vector<128x128xbf16>, vector<16x128xf32> -> vector<16x128xf32>
    %cst_4 = arith.constant 0.000000e+00 : f32
    %4 = vector.broadcast %cst_4 : f32 to vector<16x128xf32>
    %5 = arith.maximumf %3, %4 : vector<16x128xf32>
    %c0_5 = arith.constant 0 : index
    %c0_6 = arith.constant 0 : index
    %6 = vector.load %arg4[%c0_5, %c0_6] : memref<1x128xf32, #tpu.memory_space<vmem>>, vector<1x128xf32>
    %7 = vector.broadcast %6 : vector<1x128xf32> to vector<16x128xf32>
    %8 = arith.mulf %5, %7 : vector<16x128xf32>
    %c0_7 = arith.constant 0 : index
    %c0_8 = arith.constant 0 : index
    %9 = vector.load %arg5[%c0_7, %c0_8] : memref<1x128xf32, #tpu.memory_space<vmem>>, vector<1x128xf32>
    %10 = vector.broadcast %9 : vector<1x128xf32> to vector<16x128xf32>
    %11 = arith.addf %8, %10 : vector<16x128xf32>
    %c0_9 = arith.constant 0 : index
    %c0_10 = arith.constant 0 : index
    %c0_11 = arith.constant 0 : index
    %12 = vector.load %arg6[%c0_9, %c0_10, %c0_11] : memref<1x16x128xf32, #tpu.memory_space<vmem>>, vector<1x16x128xf32>
    %13 = vector.shape_cast %12 : vector<1x16x128xf32> to vector<16x128xf32>
    %14 = vector.shape_cast %11 : vector<16x128xf32> to vector<1x16x128xf32>
    tpu.vector_store %arg6[%c0_9, %c0_10, %c0_11], %14 {strides = array<i32>} : memref<1x16x128xf32, #tpu.memory_space<vmem>>, vector<1x16x128xf32>,
    return
  }
  func.func @transform_0(%arg0: i32, %arg1: i32) -> (i32, i32, i32) {
    %c0_i32 = arith.constant 0 : i32
    %c0_i32_0 = arith.constant 0 : i32
    return %arg0, %arg1, %c0_i32 : i32, i32, i32
  }
  func.func @transform_1(%arg0: i32, %arg1: i32) -> (i32, i32) {
    %c0_i32 = arith.constant 0 : i32
    %c0_i32_0 = arith.constant 0 : i32
    %c0_i32_1 = arith.constant 0 : i32
    return %c0_i32, %c0_i32_0 : i32, i32
  }
  func.func @transform_2(%arg0: i32, %arg1: i32) -> (i32, i32) {
    %c0_i32 = arith.constant 0 : i32
    %c0_i32_0 = arith.constant 0 : i32
    %c0_i32_1 = arith.constant 0 : i32
    return %c0_i32, %c0_i32_0 : i32, i32
  }
  func.func @transform_3(%arg0: i32, %arg1: i32) -> (i32, i32) {
    %c0_i32 = arith.constant 0 : i32
    %c0_i32_0 = arith.constant 0 : i32
    %c0_i32_1 = arith.constant 0 : i32
    return %c0_i32, %c0_i32_0 : i32, i32
  }
  func.func @transform_4(%arg0: i32, %arg1: i32) -> (i32, i32, i32) {
    %c0_i32 = arith.constant 0 : i32
    %c0_i32_0 = arith.constant 0 : i32
    return %arg0, %arg1, %c0_i32 : i32, i32, i32
  }
}

module attributes {stable_mosaic.version = 11 : i64} {
  func.func @_bn_conv_im2col_kernel(%arg0: i32, %arg1: i32, %arg2: memref<1x16x128xbf16, #tpu.memory_space<vmem>>, %arg3: memref<128x128xbf16, #tpu.memory_space<vmem>>, %arg4: memref<1x128xf32, #tpu.memory_space<vmem>>, %arg5: memref<1x128xf32, #tpu.memory_space<vmem>>, %arg6: memref<1x16x128xf32, #tpu.memory_space<vmem>>) attributes {dimension_semantics = [#tpu.dimension_semantics<parallel>, #tpu.dimension_semantics<parallel>], iteration_bounds = array<i64: 2, 1>, scalar_prefetch = 0 : i64, scratch_operands = 0 : i64, tpu.core_type = #tpu.core_type<tc>, window_params = [{transform_indices = @transform_0, window_bounds = array<i64: 1, 16, 128>}, {pipeline_mode = #tpu.pipeline_mode<synchronous>, transform_indices = @transform_1, window_bounds = array<i64: 128, 128>}, {pipeline_mode = #tpu.pipeline_mode<synchronous>, transform_indices = @transform_2, window_bounds = array<i64: 1, 128>}, {pipeline_mode = #tpu.pipeline_mode<synchronous>, transform_indices = @transform_3, window_bounds = array<i64: 1, 128>}, {transform_indices = @transform_4, window_bounds = array<i64: 1, 16, 128>}]} {
    %c0 = arith.constant 0 : index
    %c0_0 = arith.constant 0 : index
    %c0_1 = arith.constant 0 : index
    %0 = vector.load %arg2[%c0, %c0_0, %c0_1] : memref<1x16x128xbf16, #tpu.memory_space<vmem>>, vector<1x16x128xbf16>
    %1 = vector.shape_cast %0 : vector<1x16x128xbf16> to vector<16x128xbf16>
    %c0_2 = arith.constant 0 : index
    %c0_3 = arith.constant 0 : index
    %2 = vector.load %arg3[%c0_2, %c0_3] : memref<128x128xbf16, #tpu.memory_space<vmem>>, vector<128x128xbf16>
    %cst = arith.constant dense<0.000000e+00> : vector<16x128xf32>
    %3 = tpu.matmul %1, %2, %cst {dimension_numbers = #tpu.dot_dimension_numbers<[1], [0], [0], [1], [0, 0, 1, 1], [], []>} : vector<16x128xbf16>, vector<128x128xbf16>, vector<16x128xf32> -> vector<16x128xf32>
    %cst_4 = arith.constant 0.000000e+00 : f32
    %4 = vector.broadcast %cst_4 : f32 to vector<16x128xf32>
    %5 = arith.maximumf %3, %4 : vector<16x128xf32>
    %c0_5 = arith.constant 0 : index
    %c0_6 = arith.constant 0 : index
    %6 = vector.load %arg4[%c0_5, %c0_6] : memref<1x128xf32, #tpu.memory_space<vmem>>, vector<1x128xf32>
    %7 = vector.broadcast %6 : vector<1x128xf32> to vector<16x128xf32>
    %8 = arith.mulf %5, %7 : vector<16x128xf32>
    %c0_7 = arith.constant 0 : index
    %c0_8 = arith.constant 0 : index
    %9 = vector.load %arg5[%c0_7, %c0_8] : memref<1x128xf32, #tpu.memory_space<vmem>>, vector<1x128xf32>
    %10 = vector.broadcast %9 : vector<1x128xf32> to vector<16x128xf32>
    %11 = arith.addf %8, %10 : vector<16x128xf32>
    %c0_9 = arith.constant 0 : index
    %c0_10 = arith.constant 0 : index
    %c0_11 = arith.constant 0 : index
    %12 = vector.load %arg6[%c0_9, %c0_10, %c0_11] : memref<1x16x128xf32, #tpu.memory_space<vmem>>, vector<1x16x128xf32>
    %13 = vector.shape_cast %12 : vector<1x16x128xf32> to vector<16x128xf32>
    %14 = vector.shape_cast %11 : vector<16x128xf32> to vector<1x16x128xf32>
    tpu.vector_store %arg6[%c0_9, %c0_10, %c0_11], %14 {strides = array<i32>} : memref<1x16x128xf32, #tpu.memory_space<vmem>>, vector<1x16x128xf32>,
    return
  }
  func.func @transform_0(%arg0: i32, %arg1: i32) -> (i32, i32, i32) {
    %c0_i32 = arith.constant 0 : i32
    %c0_i32_0 = arith.constant 0 : i32
    return %arg0, %arg1, %c0_i32 : i32, i32, i32
  }
  func.func @transform_1(%arg0: i32, %arg1: i32) -> (i32, i32) {
    %c0_i32 = arith.constant 0 : i32
    %c0_i32_0 = arith.constant 0 : i32
    %c0_i32_1 = arith.constant 0 : i32
    return %c0_i32, %c0_i32_0 : i32, i32
  }
  func.func @transform_2(%arg0: i32, %arg1: i32) -> (i32, i32) {
    %c0_i32 = arith.constant 0 : i32
    %c0_i32_0 = arith.constant 0 : i32
    %c0_i32_1 = arith.constant 0 : i32
    return %c0_i32, %c0_i32_0 : i32, i32
  }
  func.func @transform_3(%arg0: i32, %arg1: i32) -> (i32, i32) {
    %c0_i32 = arith.constant 0 : i32
    %c0_i32_0 = arith.constant 0 : i32
    %c0_i32_1 = arith.constant 0 : i32
    return %c0_i32, %c0_i32_0 : i32, i32
  }
  func.func @transform_4(%arg0: i32, %arg1: i32) -> (i32, i32, i32) {
    %c0_i32 = arith.constant 0 : i32
    %c0_i32_0 = arith.constant 0 : i32
    return %arg0, %arg1, %c0_i32 : i32, i32, i32
  }
}

</mosaic_0001>

<llo_original>
// kernel: tpu_custom_call.1
$region0: #{tpu_custom_call.1}
  #allocation0 [shape = 'u32[]', space=smem, size = 0x4, offset = 0x4, fixed_abs, tag = 'smem constant byte address 0x4 - core index']
  #allocation1 [shape = 'u32[72,128]{1,0:T(1,128)}', space=vmem, size = 0x9000, scoped, tag = 'internal scratch']
  %s0 = inlined_call_operand.hbm [shape: bf16[2,16,128], index: 0, kind: input, shape index: {}]
  %s1 = inlined_call_operand.hbm [shape: bf16[128,128], index: 1, kind: input, shape index: {}]
  %s2 = inlined_call_operand.vmem [shape: f32[1,128], index: 2, kind: input, shape index: {}]
  %s3 = inlined_call_operand.vmem [shape: f32[1,128], index: 3, kind: input, shape index: {}]
  %s4 = inlined_call_operand.hbm [shape: f32[2,16,128], index: 4, kind: output, shape index: {}]
  %s5 = sld [smem:[#allocation0]]
  $region57: #{tpu_custom_call.1} parent=0
    _
  %s7 = ssub.s32 1, %s5
  %s8 = scalar_select 0, %s7, %s5
  $region1: #{tpu_custom_call.1} parent=0
    #allocation2 [shape = 'u8[8192]{0}', space=vmem, size = 0x2000, scoped, tag = 'input window, operand 0']
    #allocation3 [shape = 's32[2]{0}', space=sflag, size = 0x8, scoped, tag = 'scoped memory for tpu_custom_call.1']
    #allocation4 [shape = 's32[2]{0}', space=sflag, size = 0x8, scoped, tag = 'scoped memory for tpu_custom_call.1']
    #allocation5 [shape = 'u8[32768]{0}', space=vmem, size = 0x8000, scoped, tag = 'input window, operand 1, single buffered']
    #allocation6 [shape = 's32[1]{0}', space=sflag, size = 0x4, scoped, tag = 'scoped memory for tpu_custom_call.1']
    #allocation7 [shape = 'u8[16384]{0}', space=vmem, size = 0x4000, scoped, tag = 'output window, operand 0']
    %9 = vsyncpa [#allocation3], 0
    %s10 = scalar_lea.sflag [#allocation3], 1
    %11 = vsyncpa %s10, 0
    %12 = vsyncpa [#allocation6], 0
    %13 = vsyncpa [#allocation4], 0
    %s14 = scalar_lea.sflag [#allocation4], 1
    %15 = vsyncpa %s14, 0
    loop: start=0, step=1, limit=4
    $region2: #{tpu_custom_call.1} parent=1 // loop_pre_header
      _
    $region3: #{tpu_custom_call.1} parent=1 // loop_header
      %s17 = sphi 0, %s21
      %p18 = scmp.ge.s32.totalorder %s17, 4
      %s24 = sphi 0, %s36
      %s25 = sphi 0, %s32
      %s26 = sphi 0, %s24
      %s27 = sphi 0, %s25
      %s28 = sphi 0, %s26
      %s29 = sphi 0, %s27
      %s41 = sphi 0, %s43
      %s44 = sphi 0, %s41
      %s45 = sphi 0, %s44
      %s61 = sphi 0, %s45
      %s65 = sphi 0, %s65
      %s67 = sphi 0, %s65
      %s68 = sphi 0, %s67
      %s82 = sphi 0, %s68
      %s86 = sphi 0, %s86
      %s88 = sphi 0, %s86
      %s89 = sphi 0, %s88
      %s103 = sphi 0, %s89
      %s107 = sphi 0, %s107
      %s109 = sphi 0, %s107
      %s110 = sphi 0, %s109
      %s124 = sphi 0, %s110
      %s132 = sphi 0, %s134
      %s135 = sphi 0, %s132
      %s136 = sphi 0, %s135
      %s152 = sphi 0, %s136
    $region4: #{tpu_custom_call.1} parent=1 // loop_header_branch
      %20 = sbr.rel (%p18) target = $region8
    $region5: #{tpu_custom_call.1} parent=1 // loop_body
      %s22 = ssub.s32 %s17, 1
      %s23 = ssub.s32 %s17, 2
      %s30 = sadd.s32 1, %s25
      %p31 = scmp.ge.s32.totalorder %s30, 1
      %s32 = scalar_select %p31, 0, %s30
      %s33 = sadd.s32 1, %s24
      %s34 = scalar_select %p31, %s33, %s24
      %p35 = scmp.ge.s32.totalorder %s34, 2
      %s36 = scalar_select %p35, 0, %s34
      %s37 = ssub.s32 %s24, %s36
      %s38 = ssub.s32 %s25, %s32
      %s39 = sor.u32 %s37, %s38
      %p40 = scmp.eq.s32.totalorder %s39, 0
      %s42 = sadd.s32 %s41, 1
      %s43 = scalar_select %p40, %s41, %s42
      %p46 = pneg %p40
      %p47 = scmp.eq.s32.totalorder %s17, 1
      %p48 = por %p46, %p47
      %p49 = scmp.ne.s32.totalorder %s41, %s44
      %p50 = scmp.eq.s32.totalorder %s17, 0
      %p51 = por %p49, %p50
      %p52 = scmp.ne.s32.totalorder %s41, %s44
      %p53 = scmp.eq.s32.totalorder %s22, 1
      %p54 = por %p52, %p53
      %p55 = scmp.ne.s32.totalorder %s44, %s45
      %p56 = scmp.eq.s32.totalorder %s22, 0
      %p57 = por %p55, %p56
      %p58 = scmp.ne.s32.totalorder %s44, %s45
      %p59 = scmp.eq.s32.totalorder %s23, 1
      %p60 = por %p58, %p59
      %p62 = scmp.ne.s32.totalorder %s45, %s61
      %p63 = scmp.eq.s32.totalorder %s23, 0
      %p64 = por %p62, %p63
      %s66 = sadd.s32 %s65, 1
      %p69 = scmp.eq.s32.totalorder %s17, 1
      %p70 = scmp.ne.s32.totalorder %s65, %s67
      %p71 = scmp.eq.s32.totalorder %s17, 0
      %p72 = por %p70, %p71
      %p73 = scmp.ne.s32.totalorder %s65, %s67
      %p74 = scmp.eq.s32.totalorder %s22, 1
      %p75 = por %p73, %p74
      %p76 = scmp.ne.s32.totalorder %s67, %s68
      %p77 = scmp.eq.s32.totalorder %s22, 0
      %p78 = por %p76, %p77
      %p79 = scmp.ne.s32.totalorder %s67, %s68
      %p80 = scmp.eq.s32.totalorder %s23, 1
      %p81 = por %p79, %p80
      %p83 = scmp.ne.s32.totalorder %s68, %s82
      %p84 = scmp.eq.s32.totalorder %s23, 0
      %p85 = por %p83, %p84
      %s87 = sadd.s32 %s86, 1
      %p90 = scmp.eq.s32.totalorder %s17, 1
      %p91 = scmp.ne.s32.totalorder %s86, %s88
      %p92 = scmp.eq.s32.totalorder %s17, 0
      %p93 = por %p91, %p92
      %p94 = scmp.ne.s32.totalorder %s86, %s88
      %p95 = scmp.eq.s32.totalorder %s22, 1
      %p96 = por %p94, %p95
      %p97 = scmp.ne.s32.totalorder %s88, %s89
      %p98 = scmp.eq.s32.totalorder %s22, 0
      %p99 = por %p97, %p98
      %p100 = scmp.ne.s32.totalorder %s88, %s89
      %p101 = scmp.eq.s32.totalorder %s23, 1
      %p102 = por %p100, %p101
      %p104 = scmp.ne.s32.totalorder %s89, %s103
      %p105 = scmp.eq.s32.totalorder %s23, 0
      %p106 = por %p104, %p105
      %s108 = sadd.s32 %s107, 1
      %p111 = scmp.eq.s32.totalorder %s17, 1
      %p112 = scmp.ne.s32.totalorder %s107, %s109
      %p113 = scmp.eq.s32.totalorder %s17, 0
      %p114 = por %p112, %p113
      %p115 = scmp.ne.s32.totalorder %s107, %s109
      %p116 = scmp.eq.s32.totalorder %s22, 1
      %p117 = por %p115, %p116
      %p118 = scmp.ne.s32.totalorder %s109, %s110
      %p119 = scmp.eq.s32.totalorder %s22, 0
      %p120 = por %p118, %p119
      %p121 = scmp.ne.s32.totalorder %s109, %s110
      %p122 = scmp.eq.s32.totalorder %s23, 1
      %p123 = por %p121, %p122
      %p125 = scmp.ne.s32.totalorder %s110, %s124
      %p126 = scmp.eq.s32.totalorder %s23, 0
      %p127 = por %p125, %p126
      %s128 = ssub.s32 %s24, %s36
      %s129 = ssub.s32 %s25, %s32
      %s130 = sor.u32 %s128, %s129
      %p131 = scmp.eq.s32.totalorder %s130, 0
      %s133 = sadd.s32 %s132, 1
      %s134 = scalar_select %p131, %s132, %s133
      %p137 = pneg %p131
      %p138 = scmp.eq.s32.totalorder %s17, 1
      %p139 = por %p137, %p138
      %p140 = scmp.ne.s32.totalorder %s132, %s135
      %p141 = scmp.eq.s32.totalorder %s17, 0
      %p142 = por %p140, %p141
      %p143 = scmp.ne.s32.totalorder %s132, %s135
      %p144 = scmp.eq.s32.totalorder %s22, 1
      %p145 = por %p143, %p144
      %p146 = scmp.ne.s32.totalorder %s135, %s136
      %p147 = scmp.eq.s32.totalorder %s22, 0
      %p148 = por %p146, %p147
      %p149 = scmp.ne.s32.totalorder %s135, %s136
      %p150 = scmp.eq.s32.totalorder %s23, 1
      %p151 = por %p149, %p150
      %p153 = scmp.ne.s32.totalorder %s136, %s152
      %p154 = scmp.eq.s32.totalorder %s23, 0
      %p155 = por %p153, %p154
      %p156 = scmp.le.s32.totalorder 1, %s17
      %p157 = scmp.lt.s32.totalorder %s17, 3
      %p158 = pnand %p156, %p157
      %p159 = pneg %p158
      // Predicated region
      $region9: #{tpu_custom_call.1} parent=5 // pred_check
        _
      $region10: #{tpu_custom_call.1} parent=5 // pred_check_branch
        %161 = sbr.rel (%p158) target = $region12
      $region11: #{tpu_custom_call.1} parent=5 // pred_region
        %s162 = ssub.s32 %s17, 1
        // Predicated region
        $region13: #{tpu_custom_call.1} parent=11 // pred_check
          %p163 = pneg %p78
        $region14: #{tpu_custom_call.1} parent=11 // pred_check_branch
          %165 = sbr.rel (%p163) target = $region16
        $region15: #{tpu_custom_call.1} parent=11 // pred_region
          %167 = vsyncadd [#allocation6], 0
          %s168 = sshll.u32 %s1, 4
          %s169 = int_to_ptr.hbm [resolvable:$true] %s168
          %s170 = sshll.u32 [#allocation5], 4
          %s171 = int_to_ptr.vmem [resolvable:$true] %s170
          %176 = dma.hbm_to_vmem [thread:$0]  %s169, 1024, %s171, [#allocation6], 64, 64, 4
        $region16: #{tpu_custom_call.1} parent=11 // pred_fallthru
          _
        // Predicated region
        $region17: #{tpu_custom_call.1} parent=11 // pred_check
          %p177 = pneg %p99
        $region18: #{tpu_custom_call.1} parent=11 // pred_check_branch
          %179 = sbr.rel (%p177) target = $region20
        $region19: #{tpu_custom_call.1} parent=11 // pred_region
          _
        $region20: #{tpu_custom_call.1} parent=11 // pred_fallthru
          _
        // Predicated region
        $region21: #{tpu_custom_call.1} parent=11 // pred_check
          %p180 = pneg %p120
        $region22: #{tpu_custom_call.1} parent=11 // pred_check_branch
          %182 = sbr.rel (%p180) target = $region24
        $region23: #{tpu_custom_call.1} parent=11 // pred_region
          _
        $region24: #{tpu_custom_call.1} parent=11 // pred_fallthru
          _
      $region12: #{tpu_custom_call.1} parent=5 // pred_fallthru
        _
      %p183 = scmp.lt.s32.totalorder %s17, 2
      // Predicated region
      $region25: #{tpu_custom_call.1} parent=5 // pred_check
        %p184 = pneg %p183
      $region26: #{tpu_custom_call.1} parent=5 // pred_check_branch
        %186 = sbr.rel (%p184) target = $region28
      $region27: #{tpu_custom_call.1} parent=5 // pred_region
        // Predicated region
        $region29: #{tpu_custom_call.1} parent=27 // pred_check
          %p187 = pneg %p51
        $region30: #{tpu_custom_call.1} parent=27 // pred_check_branch
          %189 = sbr.rel (%p187) target = $region32
        $region31: #{tpu_custom_call.1} parent=27 // pred_region
          %s190 = sand.u32 %s41, 1
          %s191 = scalar_lea.sflag [#allocation3], %s190
          %s192 = sand.u32 %s41, 1
          %s193 = smul.addr %s192, 8
          %s194 = scalar_lea.vmem [#allocation2], %s193
          %s195 = smul.u32 2, %s25
          %197 = vsyncadd %s191, 0
          %s198 = smul.addr %s24, 2
          %s199 = sadd.s32 %s195, %s198
          %s200 = smul.addr %s199, 4
          %s201 = scalar_lea.hbm %s0, %s200
          %s202 = sshll.u32 %s201, 4
          %s203 = int_to_ptr.hbm [resolvable:$true] %s202
          %s204 = sshll.u32 %s194, 4
          %s205 = int_to_ptr.vmem [resolvable:$true] %s204
          %210 = dma.hbm_to_vmem [thread:$0]  %s203, 128, %s205, %s191, 64, 64, 4
        $region32: #{tpu_custom_call.1} parent=27 // pred_fallthru
          _
      $region28: #{tpu_custom_call.1} parent=5 // pred_fallthru
        _
      %p211 = scmp.le.s32.totalorder 1, %s17
      %p212 = scmp.lt.s32.totalorder %s17, 3
      %p213 = pnand %p211, %p212
      %p214 = pneg %p213
      // Predicated region
      $region33: #{tpu_custom_call.1} parent=5 // pred_check
        _
      $region34: #{tpu_custom_call.1} parent=5 // pred_check_branch
        %216 = sbr.rel (%p213) target = $region36
      $region35: #{tpu_custom_call.1} parent=5 // pred_region
        %s217 = ssub.s32 %s17, 1
        %s218 = sand.u32 %s44, 1
        %s219 = scalar_lea.sflag [#allocation3], %s218
        %s220 = sand.u32 %s44, 1
        %s221 = smul.addr %s220, 8
        %s222 = scalar_lea.vmem [#allocation2], %s221
        // Predicated region
        $region37: #{tpu_custom_call.1} parent=35 // pred_check
          %p223 = pneg %p57
        $region38: #{tpu_custom_call.1} parent=35 // pred_check_branch
          %225 = sbr.rel (%p223) target = $region40
        $region39: #{tpu_custom_call.1} parent=35 // pred_region
          %227 = dma.done %s219, 128
        $region40: #{tpu_custom_call.1} parent=35 // pred_fallthru
          _
        // Predicated region
        $region41: #{tpu_custom_call.1} parent=35 // pred_check
          %p228 = pneg %p78
        $region42: #{tpu_custom_call.1} parent=35 // pred_check_branch
          %230 = sbr.rel (%p228) target = $region44
        $region43: #{tpu_custom_call.1} parent=35 // pred_region
          %232 = dma.done [#allocation6], 1024
        $region44: #{tpu_custom_call.1} parent=35 // pred_fallthru
          _
        %s233 = sand.u32 %s44, 1
        %s234 = scalar_lea.sflag [#allocation3], %s233
        %s235 = sand.u32 %s44, 1
        %s236 = smul.addr %s235, 8
        %s237 = scalar_lea.vmem [#allocation2], %s236
        %p238 = pneg %p57
        %p239 = pneg %p54
        %p240 = pneg %p78
        %p241 = pneg %p75
        %p242 = pneg %p99
        %p243 = pneg %p96
        %p244 = pneg %p120
        %p245 = pneg %p117
        %p246 = pneg %p148
        %p247 = pneg %p145
        %s248 = sand.u32 %s135, 1
        %s249 = scalar_lea.sflag [#allocation4], %s248
        %s250 = sand.u32 %s135, 1
        %s251 = smul.addr %s250, 16
        %s252 = scalar_lea.vmem [#allocation7], %s251
        %s253 = smul.u32 2, %s27
        %s254 = smul.u32 2, %s27
        %v255 = vld [vmem:[%s222] sm:$0xf]
        %v256 = vld [vmem:[%s222 + $0x4] sm:$0xf]
        %v257 = vld [vmem:[#allocation5] sm:$0xf]
        %v258 = vld [vmem:[#allocation5 + $0x4] sm:$0xf]
        %v259 = vld [vmem:[#allocation5 + $0x8] sm:$0xf]
        %v260 = vld [vmem:[#allocation5 + $0xc] sm:$0xf]
        %v261 = vld [vmem:[#allocation5 + $0x10] sm:$0xf]
        %v262 = vld [vmem:[#allocation5 + $0x14] sm:$0xf]
        %v263 = vld [vmem:[#allocation5 + $0x18] sm:$0xf]
        %v264 = vld [vmem:[#allocation5 + $0x1c] sm:$0xf]
        %v265 = vld [vmem:[#allocation5 + $0x20] sm:$0xf]
        %v266 = vld [vmem:[#allocation5 + $0x24] sm:$0xf]
        %v267 = vld [vmem:[#allocation5 + $0x28] sm:$0xf]
        %v268 = vld [vmem:[#allocation5 + $0x2c] sm:$0xf]
        %v269 = vld [vmem:[#allocation5 + $0x30] sm:$0xf]
        %v270 = vld [vmem:[#allocation5 + $0x34] sm:$0xf]
        %v271 = vld [vmem:[#allocation5 + $0x38] sm:$0xf]
        %v272 = vld [vmem:[#allocation5 + $0x3c] sm:$0xf]
        %v275 = vunpack.c.l.b16 %v255
        %v276 = vunpack.c.l.b16 %v256
        %v277 = vpack.c.b16 %v276, %v275
        %v295 = vunpack.c.l.b16 %v257
        %v296 = vunpack.c.l.b16 %v258
        %v297 = vunpack.c.l.b16 %v259
        %v298 = vunpack.c.l.b16 %v260
        %v299 = vunpack.c.l.b16 %v261
        %v300 = vunpack.c.l.b16 %v262
        %v301 = vunpack.c.l.b16 %v263
        %v302 = vunpack.c.l.b16 %v264
        %v303 = vunpack.c.l.b16 %v265
        %v304 = vunpack.c.l.b16 %v266
        %v305 = vunpack.c.l.b16 %v267
        %v306 = vunpack.c.l.b16 %v268
        %v307 = vunpack.c.l.b16 %v269
        %v308 = vunpack.c.l.b16 %v270
        %v309 = vunpack.c.l.b16 %v271
        %v310 = vunpack.c.l.b16 %v272
        %v311 = vpack.c.b16 %v296, %v295
        %v312 = vpack.c.b16 %v298, %v297
        %v313 = vpack.c.b16 %v300, %v299
        %v314 = vpack.c.b16 %v302, %v301
        %v315 = vpack.c.b16 %v304, %v303
        %v316 = vpack.c.b16 %v306, %v305
        %v317 = vpack.c.b16 %v308, %v307
        %v318 = vpack.c.b16 %v310, %v309
        %327 = vmatpush.bf16.msra.mxu0 %v318
        %328 = vmatpush.bf16.msra.mxu0 %v317
        %329 = vmatpush.bf16.msra.mxu0 %v316
        %330 = vmatpush.bf16.msra.mxu0 %v315
        %331 = vmatpush.bf16.msra.mxu0 %v314
        %332 = vmatpush.bf16.msra.mxu0 %v313
        %333 = vmatpush.bf16.msra.mxu0 %v312
        %334 = vmatpush.bf16.msra.mxu0 %v311
        %335 = vmatmul.bf16.gmra.mxu0 %v277
        %v336 = vpop.f32.mrf.mxu0
        %v337 = vadd.f32 0.0, %v336
        %v338 = vpop.f32.mrf.mxu0
        %v339 = vadd.f32 0.0, %v338
        %340 = vdwg.mxu0
        %v341 = vmax.f32 %v337, 0.0
        %v342 = vmax.f32 %v339, 0.0
        %v343 = vld [vmem:[%s2] sm:$0x1]
        %v345 = vperm.slane %v343, 0
        %v347 = vmul.f32 %v341, %v345
        %v348 = vmul.f32 %v342, %v345
        %v349 = vld [vmem:[%s3] sm:$0x1]
        %v351 = vperm.slane %v349, 0
        %v353 = vadd.f32 %v347, %v351
        %v354 = vadd.f32 %v348, %v351
        %355 = vst [vmem:[%s252] sm:$0xff] %v353
        %356 = vst [vmem:[%s252 + $0x8] sm:$0xff] %v354
        %s357 = sand.u32 %s135, 1
        %s358 = scalar_lea.sflag [#allocation4], %s357
        %s359 = sand.u32 %s135, 1
        %s360 = smul.addr %s359, 16
        %s361 = scalar_lea.vmem [#allocation7], %s360
        // Predicated region
        $region45: #{tpu_custom_call.1} parent=35 // pred_check
          %p362 = pneg %p145
        $region46: #{tpu_custom_call.1} parent=35 // pred_check_branch
          %364 = sbr.rel (%p362) target = $region48
        $region47: #{tpu_custom_call.1} parent=35 // pred_region
          %s365 = smul.u32 2, %s27
          %367 = vsyncadd %s358, 0
          %s368 = smul.addr %s26, 2
          %s369 = sadd.s32 %s365, %s368
          %s370 = smul.addr %s369, 8
          %s371 = scalar_lea.hbm %s4, %s370
          %s372 = sshll.u32 %s361, 4
          %s373 = int_to_ptr.vmem [resolvable:$true] %s372
          %s374 = sshll.u32 %s371, 4
          %s375 = int_to_ptr.hbm [resolvable:$true] %s374
          %380 = dma.vmem_to_hbm [thread:$0]  %s373, 256, %s375, %s358, 128, 128, 8
        $region48: #{tpu_custom_call.1} parent=35 // pred_fallthru
          _
      $region36: #{tpu_custom_call.1} parent=5 // pred_fallthru
        _
      %p381 = scmp.le.s32.totalorder 2, %s17
      // Predicated region
      $region49: #{tpu_custom_call.1} parent=5 // pred_check
        %p382 = pneg %p381
      $region50: #{tpu_custom_call.1} parent=5 // pred_check_branch
        %384 = sbr.rel (%p382) target = $region52
      $region51: #{tpu_custom_call.1} parent=5 // pred_region
        %s385 = ssub.s32 %s17, 2
        // Predicated region
        $region53: #{tpu_custom_call.1} parent=51 // pred_check
          %p386 = pneg %p151
        $region54: #{tpu_custom_call.1} parent=51 // pred_check_branch
          %388 = sbr.rel (%p386) target = $region56
        $region55: #{tpu_custom_call.1} parent=51 // pred_region
          %s389 = sand.u32 %s136, 1
          %s390 = scalar_lea.sflag [#allocation4], %s389
          %s391 = sand.u32 %s136, 1
          %s392 = smul.addr %s391, 16
          %s393 = scalar_lea.vmem [#allocation7], %s392
          %395 = dma.done %s390, 256
        $region56: #{tpu_custom_call.1} parent=51 // pred_fallthru
          _
      $region52: #{tpu_custom_call.1} parent=5 // pred_fallthru
        _
    $region6: #{tpu_custom_call.1} parent=1 // loop_footer
      %s21 = sadd.s32 1, %s17
    $region7: #{tpu_custom_call.1} parent=1 // loop_footer_branch
      %16 = sbr.rel target = $region3
    $region8: #{tpu_custom_call.1} parent=1 // loop_exit
      _
    %396 = vsyncpa [#allocation3], 1
    %s397 = scalar_lea.sflag [#allocation3], 1
    %398 = vsyncpa %s397, 1
    %399 = vsyncpa [#allocation6], 1
    %400 = vsyncpa [#allocation4], 1
    %s401 = scalar_lea.sflag [#allocation4], 1
    %402 = vsyncpa %s401, 1

// kernel: tpu_custom_call.1
$region0: #{tpu_custom_call.1}
  #allocation0 [shape = 'u32[]', space=smem, size = 0x4, offset = 0x4, fixed_abs, tag = 'smem constant byte address 0x4 - core index']
  #allocation1 [shape = 'u32[72,128]{1,0:T(1,128)}', space=vmem, size = 0x9000, scoped, tag = 'internal scratch']
  %s0 = inlined_call_operand.hbm [shape: bf16[2,16,128], index: 0, kind: input, shape index: {}]
  %s1 = inlined_call_operand.hbm [shape: bf16[128,128], index: 1, kind: input, shape index: {}]
  %s2 = inlined_call_operand.vmem [shape: f32[1,128], index: 2, kind: input, shape index: {}]
  %s3 = inlined_call_operand.vmem [shape: f32[1,128], index: 3, kind: input, shape index: {}]
  %s4 = inlined_call_operand.hbm [shape: f32[2,16,128], index: 4, kind: output, shape index: {}]
  %s5 = sld [smem:[#allocation0]]
  $region57: #{tpu_custom_call.1} parent=0
    _
  %s7 = ssub.s32 1, %s5
  %s8 = scalar_select 0, %s7, %s5
  $region1: #{tpu_custom_call.1} parent=0
    #allocation2 [shape = 'u8[8192]{0}', space=vmem, size = 0x2000, scoped, tag = 'input window, operand 0']
    #allocation3 [shape = 's32[2]{0}', space=sflag, size = 0x8, scoped, tag = 'scoped memory for tpu_custom_call.1']
    #allocation4 [shape = 's32[2]{0}', space=sflag, size = 0x8, scoped, tag = 'scoped memory for tpu_custom_call.1']
    #allocation5 [shape = 'u8[32768]{0}', space=vmem, size = 0x8000, scoped, tag = 'input window, operand 1, single buffered']
    #allocation6 [shape = 's32[1]{0}', space=sflag, size = 0x4, scoped, tag = 'scoped memory for tpu_custom_call.1']
    #allocation7 [shape = 'u8[16384]{0}', space=vmem, size = 0x4000, scoped, tag = 'output window, operand 0']
    %9 = vsyncpa [#allocation3], 0
    %s10 = scalar_lea.sflag [#allocation3], 1
    %11 = vsyncpa %s10, 0
    %12 = vsyncpa [#allocation6], 0
    %13 = vsyncpa [#allocation4], 0
    %s14 = scalar_lea.sflag [#allocation4], 1
    %15 = vsyncpa %s14, 0
    loop: start=0, step=1, limit=4
    $region2: #{tpu_custom_call.1} parent=1 // loop_pre_header
      _
    $region3: #{tpu_custom_call.1} parent=1 // loop_header
      %s17 = sphi 0, %s21
      %p18 = scmp.ge.s32.totalorder %s17, 4
      %s24 = sphi 0, %s36
      %s25 = sphi 0, %s32
      %s26 = sphi 0, %s24
      %s27 = sphi 0, %s25
      %s28 = sphi 0, %s26
      %s29 = sphi 0, %s27
      %s41 = sphi 0, %s43
      %s44 = sphi 0, %s41
      %s45 = sphi 0, %s44
      %s61 = sphi 0, %s45
      %s65 = sphi 0, %s65
      %s67 = sphi 0, %s65
      %s68 = sphi 0, %s67
      %s82 = sphi 0, %s68
      %s86 = sphi 0, %s86
      %s88 = sphi 0, %s86
      %s89 = sphi 0, %s88
      %s103 = sphi 0, %s89
      %s107 = sphi 0, %s107
      %s109 = sphi 0, %s107
      %s110 = sphi 0, %s109
      %s124 = sphi 0, %s110
      %s132 = sphi 0, %s134
      %s135 = sphi 0, %s132
      %s136 = sphi 0, %s135
      %s152 = sphi 0, %s136
    $region4: #{tpu_custom_call.1} parent=1 // loop_header_branch
      %20 = sbr.rel (%p18) target = $region8
    $region5: #{tpu_custom_call.1} parent=1 // loop_body
      %s22 = ssub.s32 %s17, 1
      %s23 = ssub.s32 %s17, 2
      %s30 = sadd.s32 1, %s25
      %p31 = scmp.ge.s32.totalorder %s30, 1
      %s32 = scalar_select %p31, 0, %s30
      %s33 = sadd.s32 1, %s24
      %s34 = scalar_select %p31, %s33, %s24
      %p35 = scmp.ge.s32.totalorder %s34, 2
      %s36 = scalar_select %p35, 0, %s34
      %s37 = ssub.s32 %s24, %s36
      %s38 = ssub.s32 %s25, %s32
      %s39 = sor.u32 %s37, %s38
      %p40 = scmp.eq.s32.totalorder %s39, 0
      %s42 = sadd.s32 %s41, 1
      %s43 = scalar_select %p40, %s41, %s42
      %p46 = pneg %p40
      %p47 = scmp.eq.s32.totalorder %s17, 1
      %p48 = por %p46, %p47
      %p49 = scmp.ne.s32.totalorder %s41, %s44
      %p50 = scmp.eq.s32.totalorder %s17, 0
      %p51 = por %p49, %p50
      %p52 = scmp.ne.s32.totalorder %s41, %s44
      %p53 = scmp.eq.s32.totalorder %s22, 1
      %p54 = por %p52, %p53
      %p55 = scmp.ne.s32.totalorder %s44, %s45
      %p56 = scmp.eq.s32.totalorder %s22, 0
      %p57 = por %p55, %p56
      %p58 = scmp.ne.s32.totalorder %s44, %s45
      %p59 = scmp.eq.s32.totalorder %s23, 1
      %p60 = por %p58, %p59
      %p62 = scmp.ne.s32.totalorder %s45, %s61
      %p63 = scmp.eq.s32.totalorder %s23, 0
      %p64 = por %p62, %p63
      %s66 = sadd.s32 %s65, 1
      %p69 = scmp.eq.s32.totalorder %s17, 1
      %p70 = scmp.ne.s32.totalorder %s65, %s67
      %p71 = scmp.eq.s32.totalorder %s17, 0
      %p72 = por %p70, %p71
      %p73 = scmp.ne.s32.totalorder %s65, %s67
      %p74 = scmp.eq.s32.totalorder %s22, 1
      %p75 = por %p73, %p74
      %p76 = scmp.ne.s32.totalorder %s67, %s68
      %p77 = scmp.eq.s32.totalorder %s22, 0
      %p78 = por %p76, %p77
      %p79 = scmp.ne.s32.totalorder %s67, %s68
      %p80 = scmp.eq.s32.totalorder %s23, 1
      %p81 = por %p79, %p80
      %p83 = scmp.ne.s32.totalorder %s68, %s82
      %p84 = scmp.eq.s32.totalorder %s23, 0
      %p85 = por %p83, %p84
      %s87 = sadd.s32 %s86, 1
      %p90 = scmp.eq.s32.totalorder %s17, 1
      %p91 = scmp.ne.s32.totalorder %s86, %s88
      %p92 = scmp.eq.s32.totalorder %s17, 0
      %p93 = por %p91, %p92
      %p94 = scmp.ne.s32.totalorder %s86, %s88
      %p95 = scmp.eq.s32.totalorder %s22, 1
      %p96 = por %p94, %p95
      %p97 = scmp.ne.s32.totalorder %s88, %s89
      %p98 = scmp.eq.s32.totalorder %s22, 0
      %p99 = por %p97, %p98
      %p100 = scmp.ne.s32.totalorder %s88, %s89
      %p101 = scmp.eq.s32.totalorder %s23, 1
      %p102 = por %p100, %p101
      %p104 = scmp.ne.s32.totalorder %s89, %s103
      %p105 = scmp.eq.s32.totalorder %s23, 0
      %p106 = por %p104, %p105
      %s108 = sadd.s32 %s107, 1
      %p111 = scmp.eq.s32.totalorder %s17, 1
      %p112 = scmp.ne.s32.totalorder %s107, %s109
      %p113 = scmp.eq.s32.totalorder %s17, 0
      %p114 = por %p112, %p113
      %p115 = scmp.ne.s32.totalorder %s107, %s109
      %p116 = scmp.eq.s32.totalorder %s22, 1
      %p117 = por %p115, %p116
      %p118 = scmp.ne.s32.totalorder %s109, %s110
      %p119 = scmp.eq.s32.totalorder %s22, 0
      %p120 = por %p118, %p119
      %p121 = scmp.ne.s32.totalorder %s109, %s110
      %p122 = scmp.eq.s32.totalorder %s23, 1
      %p123 = por %p121, %p122
      %p125 = scmp.ne.s32.totalorder %s110, %s124
      %p126 = scmp.eq.s32.totalorder %s23, 0
      %p127 = por %p125, %p126
      %s128 = ssub.s32 %s24, %s36
      %s129 = ssub.s32 %s25, %s32
      %s130 = sor.u32 %s128, %s129
      %p131 = scmp.eq.s32.totalorder %s130, 0
      %s133 = sadd.s32 %s132, 1
      %s134 = scalar_select %p131, %s132, %s133
      %p137 = pneg %p131
      %p138 = scmp.eq.s32.totalorder %s17, 1
      %p139 = por %p137, %p138
      %p140 = scmp.ne.s32.totalorder %s132, %s135
      %p141 = scmp.eq.s32.totalorder %s17, 0
      %p142 = por %p140, %p141
      %p143 = scmp.ne.s32.totalorder %s132, %s135
      %p144 = scmp.eq.s32.totalorder %s22, 1
      %p145 = por %p143, %p144
      %p146 = scmp.ne.s32.totalorder %s135, %s136
      %p147 = scmp.eq.s32.totalorder %s22, 0
      %p148 = por %p146, %p147
      %p149 = scmp.ne.s32.totalorder %s135, %s136
      %p150 = scmp.eq.s32.totalorder %s23, 1
      %p151 = por %p149, %p150
      %p153 = scmp.ne.s32.totalorder %s136, %s152
      %p154 = scmp.eq.s32.totalorder %s23, 0
      %p155 = por %p153, %p154
      %p156 = scmp.le.s32.totalorder 1, %s17
      %p157 = scmp.lt.s32.totalorder %s17, 3
      %p158 = pnand %p156, %p157
      %p159 = pneg %p158
      // Predicated region
      $region9: #{tpu_custom_call.1} parent=5 // pred_check
        _
      $region10: #{tpu_custom_call.1} parent=5 // pred_check_branch
        %161 = sbr.rel (%p158) target = $region12
      $region11: #{tpu_custom_call.1} parent=5 // pred_region
        %s162 = ssub.s32 %s17, 1
        // Predicated region
        $region13: #{tpu_custom_call.1} parent=11 // pred_check
          %p163 = pneg %p78
        $region14: #{tpu_custom_call.1} parent=11 // pred_check_branch
          %165 = sbr.rel (%p163) target = $region16
        $region15: #{tpu_custom_call.1} parent=11 // pred_region
          %167 = vsyncadd [#allocation6], 0
          %s168 = sshll.u32 %s1, 4
          %s169 = int_to_ptr.hbm [resolvable:$true] %s168
          %s170 = sshll.u32 [#allocation5], 4
          %s171 = int_to_ptr.vmem [resolvable:$true] %s170
          %176 = dma.hbm_to_vmem [thread:$0]  %s169, 1024, %s171, [#allocation6], 64, 64, 4
        $region16: #{tpu_custom_call.1} parent=11 // pred_fallthru
          _
        // Predicated region
        $region17: #{tpu_custom_call.1} parent=11 // pred_check
          %p177 = pneg %p99
        $region18: #{tpu_custom_call.1} parent=11 // pred_check_branch
          %179 = sbr.rel (%p177) target = $region20
        $region19: #{tpu_custom_call.1} parent=11 // pred_region
          _
        $region20: #{tpu_custom_call.1} parent=11 // pred_fallthru
          _
        // Predicated region
        $region21: #{tpu_custom_call.1} parent=11 // pred_check
          %p180 = pneg %p120
        $region22: #{tpu_custom_call.1} parent=11 // pred_check_branch
          %182 = sbr.rel (%p180) target = $region24
        $region23: #{tpu_custom_call.1} parent=11 // pred_region
          _
        $region24: #{tpu_custom_call.1} parent=11 // pred_fallthru
          _
      $region12: #{tpu_custom_call.1} parent=5 // pred_fallthru
        _
      %p183 = scmp.lt.s32.totalorder %s17, 2
      // Predicated region
      $region25: #{tpu_custom_call.1} parent=5 // pred_check
        %p184 = pneg %p183
      $region26: #{tpu_custom_call.1} parent=5 // pred_check_branch
        %186 = sbr.rel (%p184) target = $region28
      $region27: #{tpu_custom_call.1} parent=5 // pred_region
        // Predicated region
        $region29: #{tpu_custom_call.1} parent=27 // pred_check
          %p187 = pneg %p51
        $region30: #{tpu_custom_call.1} parent=27 // pred_check_branch
          %189 = sbr.rel (%p187) target = $region32
        $region31: #{tpu_custom_call.1} parent=27 // pred_region
          %s190 = sand.u32 %s41, 1
          %s191 = scalar_lea.sflag [#allocation3], %s190
          %s192 = sand.u32 %s41, 1
          %s193 = smul.addr %s192, 8
          %s194 = scalar_lea.vmem [#allocation2], %s193
          %s195 = smul.u32 2, %s25
          %197 = vsyncadd %s191, 0
          %s198 = smul.addr %s24, 2
          %s199 = sadd.s32 %s195, %s198
          %s200 = smul.addr %s199, 4
          %s201 = scalar_lea.hbm %s0, %s200
          %s202 = sshll.u32 %s201, 4
          %s203 = int_to_ptr.hbm [resolvable:$true] %s202
          %s204 = sshll.u32 %s194, 4
          %s205 = int_to_ptr.vmem [resolvable:$true] %s204
          %210 = dma.hbm_to_vmem [thread:$0]  %s203, 128, %s205, %s191, 64, 64, 4
        $region32: #{tpu_custom_call.1} parent=27 // pred_fallthru
          _
      $region28: #{tpu_custom_call.1} parent=5 // pred_fallthru
        _
      %p211 = scmp.le.s32.totalorder 1, %s17
      %p212 = scmp.lt.s32.totalorder %s17, 3
      %p213 = pnand %p211, %p212
      %p214 = pneg %p213
      // Predicated region
      $region33: #{tpu_custom_call.1} parent=5 // pred_check
        _
      $region34: #{tpu_custom_call.1} parent=5 // pred_check_branch
        %216 = sbr.rel (%p213) target = $region36
      $region35: #{tpu_custom_call.1} parent=5 // pred_region
        %s217 = ssub.s32 %s17, 1
        %s218 = sand.u32 %s44, 1
        %s219 = scalar_lea.sflag [#allocation3], %s218
        %s220 = sand.u32 %s44, 1
        %s221 = smul.addr %s220, 8
        %s222 = scalar_lea.vmem [#allocation2], %s221
        // Predicated region
        $region37: #{tpu_custom_call.1} parent=35 // pred_check
          %p223 = pneg %p57
        $region38: #{tpu_custom_call.1} parent=35 // pred_check_branch
          %225 = sbr.rel (%p223) target = $region40
        $region39: #{tpu_custom_call.1} parent=35 // pred_region
          %227 = dma.done %s219, 128
        $region40: #{tpu_custom_call.1} parent=35 // pred_fallthru
          _
        // Predicated region
        $region41: #{tpu_custom_call.1} parent=35 // pred_check
          %p228 = pneg %p78
        $region42: #{tpu_custom_call.1} parent=35 // pred_check_branch
          %230 = sbr.rel (%p228) target = $region44
        $region43: #{tpu_custom_call.1} parent=35 // pred_region
          %232 = dma.done [#allocation6], 1024
        $region44: #{tpu_custom_call.1} parent=35 // pred_fallthru
          _
        %s233 = sand.u32 %s44, 1
        %s234 = scalar_lea.sflag [#allocation3], %s233
        %s235 = sand.u32 %s44, 1
        %s236 = smul.addr %s235, 8
        %s237 = scalar_lea.vmem [#allocation2], %s236
        %p238 = pneg %p57
        %p239 = pneg %p54
        %p240 = pneg %p78
        %p241 = pneg %p75
        %p242 = pneg %p99
        %p243 = pneg %p96
        %p244 = pneg %p120
        %p245 = pneg %p117
        %p246 = pneg %p148
        %p247 = pneg %p145
        %s248 = sand.u32 %s135, 1
        %s249 = scalar_lea.sflag [#allocation4], %s248
        %s250 = sand.u32 %s135, 1
        %s251 = smul.addr %s250, 16
        %s252 = scalar_lea.vmem [#allocation7], %s251
        %s253 = smul.u32 2, %s27
        %s254 = smul.u32 2, %s27
        %v255 = vld [vmem:[%s222] sm:$0xf]
        %v256 = vld [vmem:[%s222 + $0x4] sm:$0xf]
        %v257 = vld [vmem:[#allocation5] sm:$0xf]
        %v258 = vld [vmem:[#allocation5 + $0x4] sm:$0xf]
        %v259 = vld [vmem:[#allocation5 + $0x8] sm:$0xf]
        %v260 = vld [vmem:[#allocation5 + $0xc] sm:$0xf]
        %v261 = vld [vmem:[#allocation5 + $0x10] sm:$0xf]
        %v262 = vld [vmem:[#allocation5 + $0x14] sm:$0xf]
        %v263 = vld [vmem:[#allocation5 + $0x18] sm:$0xf]
        %v264 = vld [vmem:[#allocation5 + $0x1c] sm:$0xf]
        %v265 = vld [vmem:[#allocation5 + $0x20] sm:$0xf]
        %v266 = vld [vmem:[#allocation5 + $0x24] sm:$0xf]
        %v267 = vld [vmem:[#allocation5 + $0x28] sm:$0xf]
        %v268 = vld [vmem:[#allocation5 + $0x2c] sm:$0xf]
        %v269 = vld [vmem:[#allocation5 + $0x30] sm:$0xf]
        %v270 = vld [vmem:[#allocation5 + $0x34] sm:$0xf]
        %v271 = vld [vmem:[#allocation5 + $0x38] sm:$0xf]
        %v272 = vld [vmem:[#allocation5 + $0x3c] sm:$0xf]
        %v275 = vunpack.c.l.b16 %v255
        %v276 = vunpack.c.l.b16 %v256
        %v277 = vpack.c.b16 %v276, %v275
        %v295 = vunpack.c.l.b16 %v257
        %v296 = vunpack.c.l.b16 %v258
        %v297 = vunpack.c.l.b16 %v259
        %v298 = vunpack.c.l.b16 %v260
        %v299 = vunpack.c.l.b16 %v261
        %v300 = vunpack.c.l.b16 %v262
        %v301 = vunpack.c.l.b16 %v263
        %v302 = vunpack.c.l.b16 %v264
        %v303 = vunpack.c.l.b16 %v265
        %v304 = vunpack.c.l.b16 %v266
        %v305 = vunpack.c.l.b16 %v267
        %v306 = vunpack.c.l.b16 %v268
        %v307 = vunpack.c.l.b16 %v269
        %v308 = vunpack.c.l.b16 %v270
        %v309 = vunpack.c.l.b16 %v271
        %v310 = vunpack.c.l.b16 %v272
        %v311 = vpack.c.b16 %v296, %v295
        %v312 = vpack.c.b16 %v298, %v297
        %v313 = vpack.c.b16 %v300, %v299
        %v314 = vpack.c.b16 %v302, %v301
        %v315 = vpack.c.b16 %v304, %v303
        %v316 = vpack.c.b16 %v306, %v305
        %v317 = vpack.c.b16 %v308, %v307
        %v318 = vpack.c.b16 %v310, %v309
        %327 = vmatpush.bf16.msra.mxu0 %v318
        %328 = vmatpush.bf16.msra.mxu0 %v317
        %329 = vmatpush.bf16.msra.mxu0 %v316
        %330 = vmatpush.bf16.msra.mxu0 %v315
        %331 = vmatpush.bf16.msra.mxu0 %v314
        %332 = vmatpush.bf16.msra.mxu0 %v313
        %333 = vmatpush.bf16.msra.mxu0 %v312
        %334 = vmatpush.bf16.msra.mxu0 %v311
        %335 = vmatmul.bf16.gmra.mxu0 %v277
        %v336 = vpop.f32.mrf.mxu0
        %v337 = vadd.f32 0.0, %v336
        %v338 = vpop.f32.mrf.mxu0
        %v339 = vadd.f32 0.0, %v338
        %340 = vdwg.mxu0
        %v341 = vmax.f32 %v337, 0.0
        %v342 = vmax.f32 %v339, 0.0
        %v343 = vld [vmem:[%s2] sm:$0x1]
        %v345 = vperm.slane %v343, 0
        %v347 = vmul.f32 %v341, %v345
        %v348 = vmul.f32 %v342, %v345
        %v349 = vld [vmem:[%s3] sm:$0x1]
        %v351 = vperm.slane %v349, 0
        %v353 = vadd.f32 %v347, %v351
        %v354 = vadd.f32 %v348, %v351
        %355 = vst [vmem:[%s252] sm:$0xff] %v353
        %356 = vst [vmem:[%s252 + $0x8] sm:$0xff] %v354
        %s357 = sand.u32 %s135, 1
        %s358 = scalar_lea.sflag [#allocation4], %s357
        %s359 = sand.u32 %s135, 1
        %s360 = smul.addr %s359, 16
        %s361 = scalar_lea.vmem [#allocation7], %s360
        // Predicated region
        $region45: #{tpu_custom_call.1} parent=35 // pred_check
          %p362 = pneg %p145
        $region46: #{tpu_custom_call.1} parent=35 // pred_check_branch
          %364 = sbr.rel (%p362) target = $region48
        $region47: #{tpu_custom_call.1} parent=35 // pred_region
          %s365 = smul.u32 2, %s27
          %367 = vsyncadd %s358, 0
          %s368 = smul.addr %s26, 2
          %s369 = sadd.s32 %s365, %s368
          %s370 = smul.addr %s369, 8
          %s371 = scalar_lea.hbm %s4, %s370
          %s372 = sshll.u32 %s361, 4
          %s373 = int_to_ptr.vmem [resolvable:$true] %s372
          %s374 = sshll.u32 %s371, 4
          %s375 = int_to_ptr.hbm [resolvable:$true] %s374
          %380 = dma.vmem_to_hbm [thread:$0]  %s373, 256, %s375, %s358, 128, 128, 8
        $region48: #{tpu_custom_call.1} parent=35 // pred_fallthru
          _
      $region36: #{tpu_custom_call.1} parent=5 // pred_fallthru
        _
      %p381 = scmp.le.s32.totalorder 2, %s17
      // Predicated region
      $region49: #{tpu_custom_call.1} parent=5 // pred_check
        %p382 = pneg %p381
      $region50: #{tpu_custom_call.1} parent=5 // pred_check_branch
        %384 = sbr.rel (%p382) target = $region52
      $region51: #{tpu_custom_call.1} parent=5 // pred_region
        %s385 = ssub.s32 %s17, 2
        // Predicated region
        $region53: #{tpu_custom_call.1} parent=51 // pred_check
          %p386 = pneg %p151
        $region54: #{tpu_custom_call.1} parent=51 // pred_check_branch
          %388 = sbr.rel (%p386) target = $region56
        $region55: #{tpu_custom_call.1} parent=51 // pred_region
          %s389 = sand.u32 %s136, 1
          %s390 = scalar_lea.sflag [#allocation4], %s389
          %s391 = sand.u32 %s136, 1
          %s392 = smul.addr %s391, 16
          %s393 = scalar_lea.vmem [#allocation7], %s392
          %395 = dma.done %s390, 256
        $region56: #{tpu_custom_call.1} parent=51 // pred_fallthru
          _
      $region52: #{tpu_custom_call.1} parent=5 // pred_fallthru
        _
    $region6: #{tpu_custom_call.1} parent=1 // loop_footer
      %s21 = sadd.s32 1, %s17
    $region7: #{tpu_custom_call.1} parent=1 // loop_footer_branch
      %16 = sbr.rel target = $region3
    $region8: #{tpu_custom_call.1} parent=1 // loop_exit
      _
    %396 = vsyncpa [#allocation3], 1
    %s397 = scalar_lea.sflag [#allocation3], 1
    %398 = vsyncpa %s397, 1
    %399 = vsyncpa [#allocation6], 1
    %400 = vsyncpa [#allocation4], 1
    %s401 = scalar_lea.sflag [#allocation4], 1
    %402 = vsyncpa %s401, 1

</llo_original>
